<compile_context>
chip_gen: v7x
topology: tpu7x:2x2x1
jax: 0.10.0
libtpu: 0.0.40
codegen_flags: <defaults>
</compile_context>

<pallas_src>
import functools

import jax
import jax.numpy as jnp
from jax import lax
from jax.experimental import pallas as pl
from jax.experimental.pallas import tpu as pltpu


def _round_up(x, m):
    return ((x + m - 1) // m) * m


def _vmem_cap_bytes():
    """Physical VMEM capacity (generation aware); conservative fallback = v7x (64 MiB)."""
    try:
        cap = getattr(pltpu.get_tpu_info(), "vmem_capacity_bytes", None)
        if cap:
            return max(int(cap), 32 * 2**20)
    except Exception:
        pass
    return 64 * 2**20


def _choose_tm(M, cap):
    """Row tile: sublane-aligned, capped, and >=2 tiles when possible (v7x megacore)."""
    tm = min(_round_up(M, 8), cap)
    if tm >= _round_up(M, 8) and M > 8:      # single-tile case -> split so both TCs get work
        tm = _round_up((M + 1) // 2, 8)
    Mp = _round_up(M, tm)
    return tm, Mp


# ---------------------------------------------------------------------------
# Fused q/k/v projection: x @ [wq|wk|wv] + b, written directly as (3, M, E)
# ---------------------------------------------------------------------------
def _qkv_kernel(x_ref, w_ref, b_ref, o_ref):
    y = jnp.dot(x_ref[...], w_ref[0], preferred_element_type=jnp.float32)
    o_ref[0] = (y + b_ref[0].astype(jnp.float32)).astype(o_ref.dtype)


def qkv_projection(x2d, wqkv, bqkv):
    """x2d: (M, E); wqkv: (3, E, E); bqkv: (3, 1, E) -> (3, M, E)."""
    M, E = x2d.shape
    dt = x2d.dtype
    tm, Mp = _choose_tm(M, 256)
    xp = x2d if Mp == M else jnp.pad(x2d, ((0, Mp - M), (0, 0)))
    out = pl.pallas_call(
        _qkv_kernel,
        out_shape=jax.ShapeDtypeStruct((3, Mp, E), dt),
        grid=(Mp // tm, 3),
        in_specs=[
            pl.BlockSpec((tm, E), lambda i, j: (i, 0)),      # x tile stays resident over j
            pl.BlockSpec((1, E, E), lambda i, j: (j, 0, 0)),
            pl.BlockSpec((1, 1, E), lambda i, j: (j, 0, 0)),
        ],
        out_specs=pl.BlockSpec((1, tm, E), lambda i, j: (j, i, 0)),
        compiler_params=pltpu.CompilerParams(
            dimension_semantics=("parallel", "arbitrary")),
    )(xp, wqkv, bqkv)
    return out if Mp == M else out[:, :M, :]


# ---------------------------------------------------------------------------
# Attention core: per (batch, head-group) grid step, heads iterated in-kernel
# ---------------------------------------------------------------------------
def _attn_kernel(qkv_ref, o_ref, *, heads, head_dim, scale):
    # qkv_ref: (3, 1, S, W); o_ref: (1, S, W) with W = heads * head_dim
    for h in range(heads):
        lo = h * head_dim
        hi = lo + head_dim
        q = qkv_ref[0, 0, :, lo:hi]                           # (S, hd), native dtype
        k = qkv_ref[1, 0, :, lo:hi]
        v = qkv_ref[2, 0, :, lo:hi]
        # q @ k^T without any materialized transpose; f32 accumulation on the MXU.
        s = lax.dot_general(q, k, (((1,), (1,)), ((), ())),
                            preferred_element_type=jnp.float32) * scale
        # TODO(synk): optional src_mask (masked_fill with -inf before softmax) not implemented;
        # the eval/demo path uses mask=None.
        m = jnp.max(s, axis=-1, keepdims=True)
        p = jnp.exp(s - m)
        l = jnp.sum(p, axis=-1, keepdims=True)
        ctx = jnp.dot(p.astype(v.dtype), v, preferred_element_type=jnp.float32)
        # fold softmax normalization into an O(S*hd) scale; reciprocal runs on the EUP slot
        o_ref[0, :, lo:hi] = (ctx * pl.reciprocal(l, approx=True)).astype(o_ref.dtype)


def _attn_group_width(num_heads, head_dim, S, E, itemsize, budget=12 * 2**20):
    """Largest per-step head-group width W (divides E, lane-legal) fitting the budget."""
    legal = []
    for g in range(1, num_heads + 1):
        W = g * head_dim
        if E % W == 0 and (W % 128 == 0 or W == E):
            legal.append(W)
    for W in sorted(legal, reverse=True):
        if 8 * S * W * itemsize + S * S * 4 <= budget:
            return W
    return min(legal)


def attention_core(qkv, num_heads, head_dim):
    """qkv: (3, B, S, E) -> context (B, S, E). Heads live in contiguous E columns."""
    _, B, S, E = qkv.shape
    itemsize = jnp.dtype(qkv.dtype).itemsize
    W = _attn_group_width(num_heads, head_dim, S, E, itemsize)
    n_groups = E // W
    # TODO(synk): flash-style KV tiling (online softmax) for long sequences is not
    # implemented; the full (S, S) per-head score matrix is materialized in VMEM.
    kernel = functools.partial(_attn_kernel, heads=W // head_dim,
                               head_dim=head_dim,
                               scale=1.0 / float(head_dim) ** 0.5)
    return pl.pallas_call(
        kernel,
        out_shape=jax.ShapeDtypeStruct((B, S, E), qkv.dtype),
        grid=(B, n_groups),
        in_specs=[pl.BlockSpec((3, 1, S, W), lambda b, g: (0, b, 0, g))],
        out_specs=pl.BlockSpec((1, S, W), lambda b, g: (b, 0, g)),
        compiler_params=pltpu.CompilerParams(
            dimension_semantics=("parallel", "parallel")),
    )(qkv)


# ---------------------------------------------------------------------------
# Plain linear (matmul + bias), M-tiled, conditional Dout tiling
# ---------------------------------------------------------------------------
def _linear_kernel(x_ref, w_ref, b_ref, o_ref):
    y = jnp.dot(x_ref[...], w_ref[...], preferred_element_type=jnp.float32)
    o_ref[...] = (y + b_ref[...].astype(jnp.float32)).astype(o_ref.dtype)


def linear(x2d, w, b2d):
    """x2d: (M, Din); w: (Din, Dout); b2d: (1, Dout)."""
    M, Din = x2d.shape
    Dout = w.shape[1]
    dt = x2d.dtype
    itemsize = jnp.dtype(dt).itemsize
    tm, Mp = _choose_tm(M, 256)
    tn = Dout
    if Din * Dout * itemsize > 8 * 2**20:          # weight panel too big to keep resident
        for cand in (512, 256, 128):
            if Dout % cand == 0:
                tn = cand
                break
    # TODO(synk): Din (reduction) tiling for very large Din is not implemented.
    xp = x2d if Mp == M else jnp.pad(x2d, ((0, Mp - M), (0, 0)))
    out = pl.pallas_call(
        _linear_kernel,
        out_shape=jax.ShapeDtypeStruct((Mp, Dout), dt),
        grid=(Mp // tm, Dout // tn),
        in_specs=[
            pl.BlockSpec((tm, Din), lambda i, j: (i, 0)),
            pl.BlockSpec((Din, tn), lambda i, j: (0, j)),
            pl.BlockSpec((1, tn), lambda i, j: (0, j)),
        ],
        out_specs=pl.BlockSpec((tm, tn), lambda i, j: (i, j)),
        compiler_params=pltpu.CompilerParams(
            dimension_semantics=("parallel", "arbitrary")),
    )(xp, w, b2d)
    return out if Mp == M else out[:M]


# ---------------------------------------------------------------------------
# FeedForward: linear2(relu(linear1(x))), H-reduction grid with f32 accumulator
# ---------------------------------------------------------------------------
def _ffn_kernel(x_ref, w1_ref, b1_ref, w2_ref, b2_ref, o_ref, acc_ref):
    k = pl.program_id(1)

    @pl.when(k == 0)
    def _init():
        acc_ref[...] = jnp.broadcast_to(
            b2_ref[...].astype(jnp.float32), acc_ref.shape)   # fold b2 into the init

    h = jnp.dot(x_ref[...], w1_ref[...], preferred_element_type=jnp.float32)
    h = jnp.maximum(h + b1_ref[...].astype(jnp.float32), 0.0)
    # TODO(synk): nn.Dropout(p=0.1) is identity in eval mode; training dropout omitted.
    # NOTE: h is downcast to w2's dtype before the second GEMM (rounding if bf16 weights).
    acc_ref[...] += jnp.dot(h.astype(w2_ref.dtype), w2_ref[...],
                            preferred_element_type=jnp.float32)

    @pl.when(k == pl.num_programs(1) - 1)
    def _finalize():
        o_ref[...] = acc_ref[...].astype(o_ref.dtype)


def feed_forward(x, w1p, b1p, w2p, b2p):
    """x: (B, S, E); w1p: (E, Hp); b1p: (1, Hp); w2p: (Hp, E); b2p: (1, E). Hp % 128 == 0."""
    B, S, E = x.shape
    Hp = w1p.shape[1]
    M = B * S
    dt = x.dtype
    itemsize = jnp.dtype(dt).itemsize
    tm, Mp = _choose_tm(M, 256)

    vmem_cap = _vmem_cap_bytes()
    # Collapse the H reduction to one step (weights fetched once, resident across all M
    # tiles) when both panels fit a quarter of VMEM; otherwise tile H.
    if 2 * E * Hp * itemsize <= vmem_cap // 4:
        th = Hp
    else:
        th = 128
        for cand in (512, 256, 128):
            if Hp % cand == 0:
                th = cand
                break
    # TODO(synk): output-feature (E) tiling for very large E (>=4096) not implemented.

    x2d = x.reshape(M, E)
    if Mp != M:
        x2d = jnp.pad(x2d, ((0, Mp - M), (0, 0)))

    grid = (Mp // tm, Hp // th)
    block_bytes = (2 * tm * E + E * th + th * E + th + E) * itemsize + tm * E * 4
    vmem_limit = int(max(4 * 2**20, min(vmem_cap - 8 * 2**20, 4 * block_bytes)))

    cost = pl.CostEstimate(
        flops=4 * Mp * E * Hp,
        transcendentals=0,
        bytes_accessed=(2 * Mp * E + (Mp // tm) * 2 * E * Hp + Hp + E) * itemsize)

    out2d = pl.pallas_call(
        _ffn_kernel,
        out_shape=jax.ShapeDtypeStruct((Mp, E), dt),
        grid_spec=pltpu.PrefetchScalarGridSpec(
            num_scalar_prefetch=0,
            grid=grid,
            in_specs=[
                pl.BlockSpec((tm, E), lambda i, k: (i, 0)),
                pl.BlockSpec((E, th), lambda i, k: (0, k)),
                pl.BlockSpec((1, th), lambda i, k: (0, k)),
                pl.BlockSpec((th, E), lambda i, k: (k, 0)),
                pl.BlockSpec((1, E), lambda i, k: (0, 0)),
            ],
            out_specs=pl.BlockSpec((tm, E), lambda i, k: (i, 0)),
            scratch_shapes=[pltpu.VMEM((tm, E), jnp.float32)],
        ),
        compiler_params=pltpu.CompilerParams(
            dimension_semantics=("parallel", "arbitrary"),
            vmem_limit_bytes=vmem_limit),
        cost_estimate=cost,
    )(x2d, w1p, b1p, w2p, b2p)
    out = out2d if Mp == M else out2d[:M]
    return out.reshape(B, S, E)


# ---------------------------------------------------------------------------
# LayerNorm kernels (eps = 1e-5, matching nn.LayerNorm)
# ---------------------------------------------------------------------------
def _add_ln_kernel(x_ref, y_ref, g_ref, b_ref, o_ref):
    z = x_ref[...].astype(jnp.float32) + y_ref[...].astype(jnp.float32)
    mu = jnp.mean(z, axis=-1, keepdims=True)
    zc = z - mu
    var = jnp.mean(zc * zc, axis=-1, keepdims=True)
    inv = lax.rsqrt(var + 1e-5)
    o_ref[...] = (zc * inv * g_ref[...].astype(jnp.float32)
                  + b_ref[...].astype(jnp.float32)).astype(o_ref.dtype)


def _ln_kernel(x_ref, g_ref, b_ref, o_ref):
    z = x_ref[...].astype(jnp.float32)
    mu = jnp.mean(z, axis=-1, keepdims=True)
    zc = z - mu
    var = jnp.mean(zc * zc, axis=-1, keepdims=True)
    inv = lax.rsqrt(var + 1e-5)
    o_ref[...] = (zc * inv * g_ref[...].astype(jnp.float32)
                  + b_ref[...].astype(jnp.float32)).astype(o_ref.dtype)


def _ln_call(kernel, inputs2d, g2d, b2d, B, S, E):
    M = B * S
    dt = inputs2d[0].dtype
    tm, Mp = _choose_tm(M, 512)
    padded = [t if Mp == M else jnp.pad(t, ((0, Mp - M), (0, 0))) for t in inputs2d]
    row_spec = pl.BlockSpec((tm, E), lambda i: (i, 0))
    par_spec = pl.BlockSpec((1, E), lambda i: (0, 0))
    out = pl.pallas_call(
        kernel,
        out_shape=jax.ShapeDtypeStruct((Mp, E), dt),
        grid=(Mp // tm,),
        in_specs=[row_spec] * len(padded) + [par_spec, par_spec],
        out_specs=row_spec,
        compiler_params=pltpu.CompilerParams(dimension_semantics=("parallel",)),
    )(*padded, g2d, b2d)
    out = out if Mp == M else out[:M]
    return out.reshape(B, S, E)


def add_layer_norm(x, y, g2d, b2d):
    B, S, E = x.shape
    return _ln_call(_add_ln_kernel, [x.reshape(B * S, E), y.reshape(B * S, E)],
                    g2d, b2d, B, S, E)


def layer_norm(x, g2d, b2d):
    B, S, E = x.shape
    return _ln_call(_ln_kernel, [x.reshape(B * S, E)], g2d, b2d, B, S, E)


# ---------------------------------------------------------------------------
# One-time parameter preparation (hoisted out of the forward pass)
# ---------------------------------------------------------------------------
def prepare_params(layers, final_g, final_b, dtype=jnp.float32):
    """Stack q/k/v weights, pad FFN hidden dim to a multiple of 128, reshape biases/LN
    params to (1, E), cast to the compute dtype. Pass dtype=jnp.bfloat16 to feed the MXU
    native low-precision inputs (accumulation stays f32 inside the kernels)."""
    prepared = []
    for p in layers:
        E = p["wq"].shape[0]
        H = p["w1"].shape[1]
        Hp = _round_up(H, 128)
        q = {
            "wqkv": jnp.stack([p["wq"], p["wk"], p["wv"]]).astype(dtype),          # (3,E,E)
            "bqkv": jnp.stack([p["bq"], p["bk"], p["bv"]]).astype(dtype)[:, None, :],
            "wo": p["wo"].astype(dtype),
            "bo": p["bo"].astype(dtype).reshape(1, E),
            "w1": jnp.pad(p["w1"].astype(dtype), ((0, 0), (0, Hp - H))),
            "b1": jnp.pad(p["b1"].astype(dtype), (0, Hp - H)).reshape(1, Hp),
            "w2": jnp.pad(p["w2"].astype(dtype), ((0, Hp - H), (0, 0))),
            "b2": p["b2"].astype(dtype).reshape(1, E),
            "ln1_g": p["ln1_g"].astype(dtype).reshape(1, E),
            "ln1_b": p["ln1_b"].astype(dtype).reshape(1, E),
            "ln2_g": p["ln2_g"].astype(dtype).reshape(1, E),
            "ln2_b": p["ln2_b"].astype(dtype).reshape(1, E),
        }
        prepared.append(q)
    E = final_g.shape[0]
    final_ln = {"g": final_g.astype(dtype).reshape(1, E),
                "b": final_b.astype(dtype).reshape(1, E)}
    return prepared, final_ln


# ---------------------------------------------------------------------------
# Module composition: MultiHeadAttention / EncoderLayer / TransformerEncoder
# ---------------------------------------------------------------------------
def multi_head_attention(x, p, num_heads):
    B, S, E = x.shape
    hd = E // num_heads
    qkv = qkv_projection(x.reshape(B * S, E), p["wqkv"], p["bqkv"])   # (3, B*S, E)
    ctx = attention_core(qkv.reshape(3, B, S, E), num_heads, hd)      # (B, S, E)
    return linear(ctx.reshape(B * S, E), p["wo"], p["bo"]).reshape(B, S, E)


def encoder_layer(src, p, num_heads):
    # TODO(synk): residual-branch nn.Dropout is identity in eval mode.
    attn = multi_head_attention(src, p, num_heads)
    src = add_layer_norm(src, attn, p["ln1_g"], p["ln1_b"])
    ff = feed_forward(src, p["w1"], p["b1"], p["w2"], p["b2"])
    src = add_layer_norm(src, ff, p["ln2_g"], p["ln2_b"])
    return src


def transformer_encoder(src, prepared_layers, final_ln, num_heads):
    for p in prepared_layers:
        src = encoder_layer(src, p, num_heads)
    return layer_norm(src, final_ln["g"], final_ln["b"])


# ---------------------------------------------------------------------------
# Pure-JAX reference
# ---------------------------------------------------------------------------
def _ref_ln(x, g, b, eps=1e-5):
    mu = x.mean(-1, keepdims=True)
    var = ((x - mu) ** 2).mean(-1, keepdims=True)
    return (x - mu) / jnp.sqrt(var + eps) * g + b


def reference_encoder(src, layers, final_g, final_b, num_heads):
    B, S, E = src.shape
    hd = E // num_heads
    for p in layers:
        x2 = src.reshape(B * S, E)

        def proj(w, b):
            return (x2 @ w + b).reshape(B, S, num_heads, hd).transpose(0, 2, 1, 3)

        q, k, v = proj(p["wq"], p["bq"]), proj(p["wk"], p["bk"]), proj(p["wv"], p["bv"])
        s = (q @ jnp.swapaxes(k, -1, -2)) / (hd ** 0.5)
        a = jax.nn.softmax(s, axis=-1)
        ctx = (a @ v).transpose(0, 2, 1, 3).reshape(B * S, E)
        attn = (ctx @ p["wo"] + p["bo"]).reshape(B, S, E)
        src = _ref_ln(src + attn, p["ln1_g"], p["ln1_b"])
        h = jnp.maximum(src.reshape(B * S, E) @ p["w1"] + p["b1"], 0.0)
        ff = (h @ p["w2"] + p["b2"]).reshape(B, S, E)
        src = _ref_ln(src + ff, p["ln2_g"], p["ln2_b"])
    return _ref_ln(src, final_g, final_b)


if __name__ == "__main__":
    num_layers, E, num_heads, ff_dim = 2, 32, 4, 64
    B, S = 2, 8

    key = jax.random.PRNGKey(0)
    key, kx = jax.random.split(key)
    src = jax.random.normal(kx, (B, S, E), dtype=jnp.float32)

    def lin_init(k, fan_in, fan_out):
        k1, k2 = jax.random.split(k)
        lim = 1.0 / (fan_in ** 0.5)
        w = jax.random.uniform(k1, (fan_in, fan_out), jnp.float32, -lim, lim)
        b = jax.random.uniform(k2, (fan_out,), jnp.float32, -lim, lim)
        return w, b

    layers = []
    for _ in range(num_layers):
        key, *ks = jax.random.split(key, 11)
        p = {}
        p["wq"], p["bq"] = lin_init(ks[0], E, E)
        p["wk"], p["bk"] = lin_init(ks[1], E, E)
        p["wv"], p["bv"] = lin_init(ks[2], E, E)
        p["wo"], p["bo"] = lin_init(ks[3], E, E)
        p["w1"], p["b1"] = lin_init(ks[4], E, ff_dim)
        p["w2"], p["b2"] = lin_init(ks[5], ff_dim, E)
        p["ln1_g"] = 1.0 + 0.1 * jax.random.normal(ks[6], (E,), jnp.float32)
        p["ln1_b"] = 0.1 * jax.random.normal(ks[7], (E,), jnp.float32)
        p["ln2_g"] = 1.0 + 0.1 * jax.random.normal(ks[8], (E,), jnp.float32)
        p["ln2_b"] = 0.1 * jax.random.normal(ks[9], (E,), jnp.float32)
        layers.append(p)
    key, kg, kb = jax.random.split(key, 3)
    final_g = 1.0 + 0.1 * jax.random.normal(kg, (E,), jnp.float32)
    final_b = 0.1 * jax.random.normal(kb, (E,), jnp.float32)

    prepared, final_ln = prepare_params(layers, final_g, final_b, dtype=jnp.float32)

    out = transformer_encoder(src, prepared, final_ln, num_heads)
    out = jax.block_until_ready(out)

    ref = reference_encoder(src, layers, final_g, final_b, num_heads)
    assert out.shape == (B, S, E)
    assert bool(jnp.all(jnp.isfinite(out)))
    # tolerance covers MXU f32 matmul passes + EUP approx reciprocal in the softmax scale
    assert jnp.allclose(out, ref, atol=1e-2, rtol=1e-2), \
        float(jnp.max(jnp.abs(out - ref)))

    print("KERNEL_OK")
</pallas_src>

<mosaic_0001>
module attributes {stable_mosaic.version = 11 : i64} {
  func.func @_qkv_kernel(%arg0: i32, %arg1: i32, %arg2: memref<8x32xf32, #tpu.memory_space<vmem>>, %arg3: memref<1x32x32xf32, #tpu.memory_space<vmem>>, %arg4: memref<1x1x32xf32, #tpu.memory_space<vmem>>, %arg5: memref<1x8x32xf32, #tpu.memory_space<vmem>>) attributes {dimension_semantics = [#tpu.dimension_semantics<parallel>, #tpu.dimension_semantics<arbitrary>], iteration_bounds = array<i64: 2, 3>, scalar_prefetch = 0 : i64, scratch_operands = 0 : i64, tpu.core_type = #tpu.core_type<tc>, window_params = [{transform_indices = @transform_0, window_bounds = array<i64: 8, 32>}, {transform_indices = @transform_1, window_bounds = array<i64: 1, 32, 32>}, {transform_indices = @transform_2, window_bounds = array<i64: 1, 1, 32>}, {transform_indices = @transform_3, window_bounds = array<i64: 1, 8, 32>}]} {
    %c0 = arith.constant 0 : index
    %c0_0 = arith.constant 0 : index
    %0 = vector.load %arg2[%c0, %c0_0] : memref<8x32xf32, #tpu.memory_space<vmem>>, vector<8x32xf32>
    %c0_1 = arith.constant 0 : index
    %c0_2 = arith.constant 0 : index
    %c0_3 = arith.constant 0 : index
    %1 = vector.load %arg3[%c0_1, %c0_2, %c0_3] : memref<1x32x32xf32, #tpu.memory_space<vmem>>, vector<1x32x32xf32>
    %2 = vector.shape_cast %1 : vector<1x32x32xf32> to vector<32x32xf32>
    %cst = arith.constant dense<0.000000e+00> : vector<8x32xf32>
    %3 = tpu.matmul %0, %2, %cst {dimension_numbers = #tpu.dot_dimension_numbers<[1], [0], [0], [1], [0, 0, 1, 1], [], []>} : vector<8x32xf32>, vector<32x32xf32>, vector<8x32xf32> -> vector<8x32xf32>
    %c0_4 = arith.constant 0 : index
    %c0_5 = arith.constant 0 : index
    %c0_6 = arith.constant 0 : index
    %4 = vector.load %arg4[%c0_4, %c0_5, %c0_6] : memref<1x1x32xf32, #tpu.memory_space<vmem>>, vector<1x1x32xf32>
    %5 = vector.shape_cast %4 : vector<1x1x32xf32> to vector<1x32xf32>
    %6 = vector.broadcast %5 : vector<1x32xf32> to vector<8x32xf32>
    %7 = arith.addf %3, %6 : vector<8x32xf32>
    %c0_7 = arith.constant 0 : index
    %c0_8 = arith.constant 0 : index
    %c0_9 = arith.constant 0 : index
    %8 = vector.load %arg5[%c0_7, %c0_8, %c0_9] : memref<1x8x32xf32, #tpu.memory_space<vmem>>, vector<1x8x32xf32>
    %9 = vector.shape_cast %8 : vector<1x8x32xf32> to vector<8x32xf32>
    %10 = vector.shape_cast %7 : vector<8x32xf32> to vector<1x8x32xf32>
    tpu.vector_store %arg5[%c0_7, %c0_8, %c0_9], %10 {strides = array<i32>} : memref<1x8x32xf32, #tpu.memory_space<vmem>>, vector<1x8x32xf32>,
    return
  }
  func.func @transform_0(%arg0: i32, %arg1: i32) -> (i32, i32) {
    %c0_i32 = arith.constant 0 : i32
    %c0_i32_0 = arith.constant 0 : i32
    return %arg0, %c0_i32 : i32, i32
  }
  func.func @transform_1(%arg0: i32, %arg1: i32) -> (i32, i32, i32) {
    %c0_i32 = arith.constant 0 : i32
    %c0_i32_0 = arith.constant 0 : i32
    %c0_i32_1 = arith.constant 0 : i32
    return %arg1, %c0_i32, %c0_i32_0 : i32, i32, i32
  }
  func.func @transform_2(%arg0: i32, %arg1: i32) -> (i32, i32, i32) {
    %c0_i32 = arith.constant 0 : i32
    %c0_i32_0 = arith.constant 0 : i32
    %c0_i32_1 = arith.constant 0 : i32
    return %arg1, %c0_i32, %c0_i32_0 : i32, i32, i32
  }
  func.func @transform_3(%arg0: i32, %arg1: i32) -> (i32, i32, i32) {
    %c0_i32 = arith.constant 0 : i32
    %c0_i32_0 = arith.constant 0 : i32
    return %arg1, %arg0, %c0_i32 : i32, i32, i32
  }
}

</mosaic_0001>

<llo_original>
// kernel: tpu_custom_call.1
$region0: #{tpu_custom_call.1}
  #allocation0 [shape = 'u32[]', space=smem, size = 0x4, offset = 0x4, fixed_abs, tag = 'smem constant byte address 0x4 - core index']
  #allocation1 [shape = 'u32[144,128]{1,0:T(1,128)}', space=vmem, size = 0x12000, scoped, tag = 'internal scratch']
  %s0 = inlined_call_operand.hbm [shape: f32[16,32], index: 0, kind: input, shape index: {}]
  %s1 = inlined_call_operand.hbm [shape: f32[3,32,32], index: 1, kind: input, shape index: {}]
  %s2 = inlined_call_operand.vmem [shape: f32[3,1,32], index: 2, kind: input, shape index: {}]
  %s3 = inlined_call_operand.hbm [shape: f32[3,16,32], index: 3, kind: output, shape index: {}]
  %s4 = sld [smem:[#allocation0]]
  $region53: #{tpu_custom_call.1} parent=0
    _
  %s6 = ssub.s32 1, %s4
  %s7 = scalar_select 0, %s6, %s4
  $region1: #{tpu_custom_call.1} parent=0
    #allocation2 [shape = 'u8[8192]{0}', space=vmem, size = 0x2000, scoped, tag = 'input window, operand 0']
    #allocation3 [shape = 's32[2]{0}', space=sflag, size = 0x8, scoped, tag = 'scoped memory for tpu_custom_call.1']
    #allocation4 [shape = 's32[2]{0}', space=sflag, size = 0x8, scoped, tag = 'scoped memory for tpu_custom_call.1']
    #allocation5 [shape = 'u8[32768]{0}', space=vmem, size = 0x8000, scoped, tag = 'input window, operand 1']
    #allocation6 [shape = 's32[2]{0}', space=sflag, size = 0x8, scoped, tag = 'scoped memory for tpu_custom_call.1']
    #allocation7 [shape = 'u8[8192]{0}', space=vmem, size = 0x2000, scoped, tag = 'output window, operand 0']
    %8 = vsyncpa [#allocation3], 0
    %s9 = scalar_lea.sflag [#allocation3], 1
    %10 = vsyncpa %s9, 0
    %11 = vsyncpa [#allocation6], 0
    %s12 = scalar_lea.sflag [#allocation6], 1
    %13 = vsyncpa %s12, 0
    %14 = vsyncpa [#allocation4], 0
    %s15 = scalar_lea.sflag [#allocation4], 1
    %16 = vsyncpa %s15, 0
    loop: start=0, step=1, limit=8
    $region2: #{tpu_custom_call.1} parent=1 // loop_pre_header
      _
    $region3: #{tpu_custom_call.1} parent=1 // loop_header
      %s18 = sphi 0, %s22
      %p19 = scmp.ge.s32.totalorder %s18, 8
      %s25 = sphi 0, %s37
      %s26 = sphi 0, %s33
      %s27 = sphi 0, %s25
      %s28 = sphi 0, %s26
      %s29 = sphi 0, %s27
      %s30 = sphi 0, %s28
      %s40 = sphi 0, %s42
      %s43 = sphi 0, %s40
      %s44 = sphi 0, %s43
      %s60 = sphi 0, %s44
      %s66 = sphi 0, %s68
      %s69 = sphi 0, %s66
      %s70 = sphi 0, %s69
      %s86 = sphi 0, %s70
      %s92 = sphi 0, %s94
      %s95 = sphi 0, %s92
      %s96 = sphi 0, %s95
      %s112 = sphi 0, %s96
      %s120 = sphi 0, %s122
      %s123 = sphi 0, %s120
      %s124 = sphi 0, %s123
      %s140 = sphi 0, %s124
    $region4: #{tpu_custom_call.1} parent=1 // loop_header_branch
      %21 = sbr.rel (%p19) target = $region8
    $region5: #{tpu_custom_call.1} parent=1 // loop_body
      %s23 = ssub.s32 %s18, 1
      %s24 = ssub.s32 %s18, 2
      %s31 = sadd.s32 1, %s26
      %p32 = scmp.ge.s32.totalorder %s31, 3
      %s33 = scalar_select %p32, 0, %s31
      %s34 = sadd.s32 1, %s25
      %s35 = scalar_select %p32, %s34, %s25
      %p36 = scmp.ge.s32.totalorder %s35, 2
      %s37 = scalar_select %p36, 0, %s35
      %s38 = ssub.s32 %s25, %s37
      %p39 = scmp.eq.s32.totalorder %s38, 0
      %s41 = sadd.s32 %s40, 1
      %s42 = scalar_select %p39, %s40, %s41
      %p45 = pneg %p39
      %p46 = scmp.eq.s32.totalorder %s18, 5
      %p47 = por %p45, %p46
      %p48 = scmp.ne.s32.totalorder %s40, %s43
      %p49 = scmp.eq.s32.totalorder %s18, 0
      %p50 = por %p48, %p49
      %p51 = scmp.ne.s32.totalorder %s40, %s43
      %p52 = scmp.eq.s32.totalorder %s23, 5
      %p53 = por %p51, %p52
      %p54 = scmp.ne.s32.totalorder %s43, %s44
      %p55 = scmp.eq.s32.totalorder %s23, 0
      %p56 = por %p54, %p55
      %p57 = scmp.ne.s32.totalorder %s43, %s44
      %p58 = scmp.eq.s32.totalorder %s24, 5
      %p59 = por %p57, %p58
      %p61 = scmp.ne.s32.totalorder %s44, %s60
      %p62 = scmp.eq.s32.totalorder %s24, 0
      %p63 = por %p61, %p62
      %s64 = ssub.s32 %s26, %s33
      %p65 = scmp.eq.s32.totalorder %s64, 0
      %s67 = sadd.s32 %s66, 1
      %s68 = scalar_select %p65, %s66, %s67
      %p71 = pneg %p65
      %p72 = scmp.eq.s32.totalorder %s18, 5
      %p73 = por %p71, %p72
      %p74 = scmp.ne.s32.totalorder %s66, %s69
      %p75 = scmp.eq.s32.totalorder %s18, 0
      %p76 = por %p74, %p75
      %p77 = scmp.ne.s32.totalorder %s66, %s69
      %p78 = scmp.eq.s32.totalorder %s23, 5
      %p79 = por %p77, %p78
      %p80 = scmp.ne.s32.totalorder %s69, %s70
      %p81 = scmp.eq.s32.totalorder %s23, 0
      %p82 = por %p80, %p81
      %p83 = scmp.ne.s32.totalorder %s69, %s70
      %p84 = scmp.eq.s32.totalorder %s24, 5
      %p85 = por %p83, %p84
      %p87 = scmp.ne.s32.totalorder %s70, %s86
      %p88 = scmp.eq.s32.totalorder %s24, 0
      %p89 = por %p87, %p88
      %s90 = ssub.s32 %s26, %s33
      %p91 = scmp.eq.s32.totalorder %s90, 0
      %s93 = sadd.s32 %s92, 1
      %s94 = scalar_select %p91, %s92, %s93
      %p97 = pneg %p91
      %p98 = scmp.eq.s32.totalorder %s18, 5
      %p99 = por %p97, %p98
      %p100 = scmp.ne.s32.totalorder %s92, %s95
      %p101 = scmp.eq.s32.totalorder %s18, 0
      %p102 = por %p100, %p101
      %p103 = scmp.ne.s32.totalorder %s92, %s95
      %p104 = scmp.eq.s32.totalorder %s23, 5
      %p105 = por %p103, %p104
      %p106 = scmp.ne.s32.totalorder %s95, %s96
      %p107 = scmp.eq.s32.totalorder %s23, 0
      %p108 = por %p106, %p107
      %p109 = scmp.ne.s32.totalorder %s95, %s96
      %p110 = scmp.eq.s32.totalorder %s24, 5
      %p111 = por %p109, %p110
      %p113 = scmp.ne.s32.totalorder %s96, %s112
      %p114 = scmp.eq.s32.totalorder %s24, 0
      %p115 = por %p113, %p114
      %s116 = ssub.s32 %s26, %s33
      %s117 = ssub.s32 %s25, %s37
      %s118 = sor.u32 %s116, %s117
      %p119 = scmp.eq.s32.totalorder %s118, 0
      %s121 = sadd.s32 %s120, 1
      %s122 = scalar_select %p119, %s120, %s121
      %p125 = pneg %p119
      %p126 = scmp.eq.s32.totalorder %s18, 5
      %p127 = por %p125, %p126
      %p128 = scmp.ne.s32.totalorder %s120, %s123
      %p129 = scmp.eq.s32.totalorder %s18, 0
      %p130 = por %p128, %p129
      %p131 = scmp.ne.s32.totalorder %s120, %s123
      %p132 = scmp.eq.s32.totalorder %s23, 5
      %p133 = por %p131, %p132
      %p134 = scmp.ne.s32.totalorder %s123, %s124
      %p135 = scmp.eq.s32.totalorder %s23, 0
      %p136 = por %p134, %p135
      %p137 = scmp.ne.s32.totalorder %s123, %s124
      %p138 = scmp.eq.s32.totalorder %s24, 5
      %p139 = por %p137, %p138
      %p141 = scmp.ne.s32.totalorder %s124, %s140
      %p142 = scmp.eq.s32.totalorder %s24, 0
      %p143 = por %p141, %p142
      %p144 = scmp.le.s32.totalorder 1, %s18
      %p145 = scmp.lt.s32.totalorder %s18, 7
      %p146 = pnand %p144, %p145
      %p147 = pneg %p146
      // Predicated region
      $region9: #{tpu_custom_call.1} parent=5 // pred_check
        _
      $region10: #{tpu_custom_call.1} parent=5 // pred_check_branch
        %149 = sbr.rel (%p146) target = $region12
      $region11: #{tpu_custom_call.1} parent=5 // pred_region
        %s150 = ssub.s32 %s18, 1
      $region12: #{tpu_custom_call.1} parent=5 // pred_fallthru
        _
      %p151 = scmp.lt.s32.totalorder %s18, 6
      // Predicated region
      $region13: #{tpu_custom_call.1} parent=5 // pred_check
        %p152 = pneg %p151
      $region14: #{tpu_custom_call.1} parent=5 // pred_check_branch
        %154 = sbr.rel (%p152) target = $region16
      $region15: #{tpu_custom_call.1} parent=5 // pred_region
        // Predicated region
        $region17: #{tpu_custom_call.1} parent=15 // pred_check
          %p155 = pneg %p50
        $region18: #{tpu_custom_call.1} parent=15 // pred_check_branch
          %157 = sbr.rel (%p155) target = $region20
        $region19: #{tpu_custom_call.1} parent=15 // pred_region
          %s158 = sand.u32 %s40, 1
          %s159 = scalar_lea.sflag [#allocation3], %s158
          %s160 = sand.u32 %s40, 1
          %s161 = smul.addr %s160, 8
          %s162 = scalar_lea.vmem [#allocation2], %s161
          %s164 = ssub.s32 128, 128
          %165 = vsyncadd %s159, %s164
          %s166 = smul.addr %s25, 128
          %s167 = scalar_lea.hbm %s0, %s166
          %s169 = sshll.u32 %s162, 4
          %s170 = int_to_ptr.vmem [resolvable:$true] %s169
          %172 = dma.hbm_to_vmem [thread:$0]  %s167, 128, %s170, %s159
        $region20: #{tpu_custom_call.1} parent=15 // pred_fallthru
          _
        // Predicated region
        $region21: #{tpu_custom_call.1} parent=15 // pred_check
          %p173 = pneg %p76
        $region22: #{tpu_custom_call.1} parent=15 // pred_check_branch
          %175 = sbr.rel (%p173) target = $region24
        $region23: #{tpu_custom_call.1} parent=15 // pred_region
          %s176 = sand.u32 %s66, 1
          %s177 = scalar_lea.sflag [#allocation6], %s176
          %s178 = sand.u32 %s66, 1
          %s179 = smul.addr %s178, 32
          %s180 = scalar_lea.vmem [#allocation5], %s179
          %s182 = ssub.s32 512, 512
          %183 = vsyncadd %s177, %s182
          %s184 = smul.addr %s26, 4
          %s185 = smul.addr %s184, 128
          %s186 = scalar_lea.hbm %s1, %s185
          %s187 = sshll.u32 %s180, 4
          %s188 = int_to_ptr.vmem [resolvable:$true] %s187
          %193 = dma.hbm_to_vmem [thread:$0]  %s186, 512, %s188, %s177, 128, 128, 8
        $region24: #{tpu_custom_call.1} parent=15 // pred_fallthru
          _
        // Predicated region
        $region25: #{tpu_custom_call.1} parent=15 // pred_check
          %p194 = pneg %p102
        $region26: #{tpu_custom_call.1} parent=15 // pred_check_branch
          %196 = sbr.rel (%p194) target = $region28
        $region27: #{tpu_custom_call.1} parent=15 // pred_region
          %p197 = scmp.lt.s32.totalorder %s26, 2
          %s198 = scalar_select %p197, %s26, 2
          %s199 = scalar_lea.vmem %s2, %s198
        $region28: #{tpu_custom_call.1} parent=15 // pred_fallthru
          _
      $region16: #{tpu_custom_call.1} parent=5 // pred_fallthru
        _
      %p200 = scmp.le.s32.totalorder 1, %s18
      %p201 = scmp.lt.s32.totalorder %s18, 7
      %p202 = pnand %p200, %p201
      %p203 = pneg %p202
      // Predicated region
      $region29: #{tpu_custom_call.1} parent=5 // pred_check
        _
      $region30: #{tpu_custom_call.1} parent=5 // pred_check_branch
        %205 = sbr.rel (%p202) target = $region32
      $region31: #{tpu_custom_call.1} parent=5 // pred_region
        %s206 = ssub.s32 %s18, 1
        %s207 = sand.u32 %s43, 1
        %s208 = scalar_lea.sflag [#allocation3], %s207
        %s209 = sand.u32 %s43, 1
        %s210 = smul.addr %s209, 8
        %s211 = scalar_lea.vmem [#allocation2], %s210
        // Predicated region
        $region33: #{tpu_custom_call.1} parent=31 // pred_check
          %p212 = pneg %p56
        $region34: #{tpu_custom_call.1} parent=31 // pred_check_branch
          %214 = sbr.rel (%p212) target = $region36
        $region35: #{tpu_custom_call.1} parent=31 // pred_region
          %215 = dma.done %s208, 128
        $region36: #{tpu_custom_call.1} parent=31 // pred_fallthru
          _
        %s216 = sand.u32 %s69, 1
        %s217 = scalar_lea.sflag [#allocation6], %s216
        %s218 = sand.u32 %s69, 1
        %s219 = smul.addr %s218, 32
        %s220 = scalar_lea.vmem [#allocation5], %s219
        // Predicated region
        $region37: #{tpu_custom_call.1} parent=31 // pred_check
          %p221 = pneg %p82
        $region38: #{tpu_custom_call.1} parent=31 // pred_check_branch
          %223 = sbr.rel (%p221) target = $region40
        $region39: #{tpu_custom_call.1} parent=31 // pred_region
          %224 = dma.done %s217, 512
        $region40: #{tpu_custom_call.1} parent=31 // pred_fallthru
          _
        %s225 = sand.u32 %s43, 1
        %s226 = scalar_lea.sflag [#allocation3], %s225
        %s227 = sand.u32 %s43, 1
        %s228 = smul.addr %s227, 8
        %s229 = scalar_lea.vmem [#allocation2], %s228
        %p230 = pneg %p56
        %p231 = pneg %p53
        %s232 = sand.u32 %s69, 1
        %s233 = scalar_lea.sflag [#allocation6], %s232
        %s234 = sand.u32 %s69, 1
        %s235 = smul.addr %s234, 32
        %s236 = scalar_lea.vmem [#allocation5], %s235
        %p237 = pneg %p82
        %p238 = pneg %p79
        %p239 = scmp.lt.s32.totalorder %s28, 2
        %s240 = scalar_select %p239, %s28, 2
        %s241 = scalar_lea.vmem %s2, %s240
        %p242 = pneg %p108
        %p243 = pneg %p105
        %p244 = pneg %p136
        %p245 = pneg %p133
        %s246 = sand.u32 %s123, 1
        %s247 = scalar_lea.sflag [#allocation4], %s246
        %s248 = sand.u32 %s123, 1
        %s249 = smul.addr %s248, 8
        %s250 = scalar_lea.vmem [#allocation7], %s249
        %p251 = scmp.lt.s32.totalorder %s28, 2
        %s252 = scalar_select %p251, %s28, 2
        %s253 = scalar_lea.vmem %s2, %s252
        %v254 = vld [vmem:[%s211] sm:$0xff]
        %v255 = vld [vmem:[%s220] sm:$0xff]
        %v256 = vld [vmem:[%s220 + $0x8] sm:$0xff]
        %v257 = vld [vmem:[%s220 + $0x10] sm:$0xff]
        %v258 = vld [vmem:[%s220 + $0x18] sm:$0xff]
        %v259 = vld [vmem:[%s253] sm:$0x1]
        %v261 = vlaneseq
        %v262 = vshrl.u32 %v261, 7
        %v263 = vsub.s32 0, %v262
        %v264 = vrot.slane %v259, %v263
        %vm266 = vcmask 261120
        %v268 = vsel %vm266, %v254, 0
        %270 = vmatprep.subr.mxu0 0.0
        %271 = vmatpush1.msra.mxu0 %v255
        %272 = vmatprep.subr.mxu0 0.0
        %273 = vmatpush1.msra.mxu0 %v256
        %274 = vmatprep.subr.mxu0 0.0
        %275 = vmatpush1.msra.mxu0 %v257
        %276 = vmatprep.subr.mxu0 0.0
        %277 = vmatpush1.msra.mxu0 %v258
        %278 = vmatprep.subr.mxu0 0.0
        %279 = vmatpush1.msra.mxu0 0.0
        %280 = vmatprep.subr.mxu0 0.0
        %281 = vmatpush1.msra.mxu0 0.0
        %282 = vmatprep.subr.mxu0 0.0
        %283 = vmatpush1.msra.mxu0 0.0
        %284 = vmatprep.subr.mxu0 0.0
        %285 = vmatpush1.msra.mxu0 0.0
        %286 = vmatprep.subr.mxu0 0.0
        %287 = vmatpush1.msra.mxu0 0.0
        %288 = vmatprep.subr.mxu0 0.0
        %289 = vmatpush1.msra.mxu0 0.0
        %290 = vmatprep.subr.mxu0 0.0
        %291 = vmatpush1.msra.mxu0 0.0
        %292 = vmatprep.subr.mxu0 0.0
        %293 = vmatpush1.msra.mxu0 0.0
        %294 = vmatprep.subr.mxu0 0.0
        %295 = vmatpush1.msra.mxu0 0.0
        %296 = vmatprep.subr.mxu0 0.0
        %297 = vmatpush1.msra.mxu0 0.0
        %298 = vmatprep.subr.mxu0 0.0
        %299 = vmatpush1.msra.mxu0 0.0
        %300 = vmatprep.subr.mxu0 0.0
        %301 = vmatpush1.msra.mxu0 0.0
        %302 = vmatprep.subr.mxu0 0.0
        %303 = vmatpush1.msra.mxu0 0.0
        %304 = vmatprep.subr.mxu0 0.0
        %305 = vmatpush1.msra.mxu0 0.0
        %306 = vmatprep.subr.mxu0 0.0
        %307 = vmatpush1.msra.mxu0 0.0
        %308 = vmatprep.subr.mxu0 0.0
        %309 = vmatpush1.msra.mxu0 0.0
        %310 = vmatprep.subr.mxu0 0.0
        %311 = vmatpush1.msra.mxu0 0.0
        %312 = vmatprep.subr.mxu0 0.0
        %313 = vmatpush1.msra.mxu0 0.0
        %314 = vmatprep.subr.mxu0 0.0
        %315 = vmatpush1.msra.mxu0 0.0
        %316 = vmatprep.subr.mxu0 0.0
        %317 = vmatpush1.msra.mxu0 0.0
        %318 = vmatprep.subr.mxu0 0.0
        %319 = vmatpush1.msra.mxu0 0.0
        %320 = vmatprep.subr.mxu0 0.0
        %321 = vmatpush1.msra.mxu0 0.0
        %322 = vmatprep.subr.mxu0 0.0
        %323 = vmatpush1.msra.mxu0 0.0
        %324 = vmatprep.subr.mxu0 0.0
        %325 = vmatpush1.msra.mxu0 0.0
        %326 = vmatprep.subr.mxu0 0.0
        %327 = vmatpush1.msra.mxu0 0.0
        %328 = vmatprep.subr.mxu0 0.0
        %329 = vmatpush1.msra.mxu0 0.0
        %330 = vmatprep.subr.mxu0 0.0
        %331 = vmatpush1.msra.mxu0 0.0
        %332 = vmatprep.subr.mxu0 0.0
        %333 = vmatpush1.msra.mxu0 0.0
        %334 = vmatprep.mubr.f32.mxu0 0.0
        %335 = vmatmul.mubr.f32.gmra.mrb[0].mxu0 %v268
        %v336 = vpop.f32.mrb[0].mxu0
        %v337 = vadd.f32 %v264, %v336
        %v338 = vpop.f32.mrb[0].mxu0
        %339 = vdwg.mxu0
        %340 = vst.msk [vmem:[%s250] sm:$0xff] %vm266, %v337
        %s341 = sand.u32 %s123, 1
        %s342 = scalar_lea.sflag [#allocation4], %s341
        %s343 = sand.u32 %s123, 1
        %s344 = smul.addr %s343, 8
        %s345 = scalar_lea.vmem [#allocation7], %s344
        // Predicated region
        $region41: #{tpu_custom_call.1} parent=31 // pred_check
          %p346 = pneg %p133
        $region42: #{tpu_custom_call.1} parent=31 // pred_check_branch
          %348 = sbr.rel (%p346) target = $region44
        $region43: #{tpu_custom_call.1} parent=31 // pred_region
          %s350 = ssub.s32 128, 128
          %351 = vsyncadd %s342, %s350
          %s352 = smul.addr %s28, 2
          %s353 = sadd.s32 %s27, %s352
          %s354 = smul.addr %s353, 128
          %s355 = scalar_lea.hbm %s3, %s354
          %s357 = sshll.u32 %s345, 4
          %s358 = int_to_ptr.vmem [resolvable:$true] %s357
          %360 = dma.vmem_to_hbm [thread:$0]  %s358, 128, %s355, %s342
        $region44: #{tpu_custom_call.1} parent=31 // pred_fallthru
          _
      $region32: #{tpu_custom_call.1} parent=5 // pred_fallthru
        _
      %p361 = scmp.le.s32.totalorder 2, %s18
      // Predicated region
      $region45: #{tpu_custom_call.1} parent=5 // pred_check
        %p362 = pneg %p361
      $region46: #{tpu_custom_call.1} parent=5 // pred_check_branch
        %364 = sbr.rel (%p362) target = $region48
      $region47: #{tpu_custom_call.1} parent=5 // pred_region
        %s365 = ssub.s32 %s18, 2
        // Predicated region
        $region49: #{tpu_custom_call.1} parent=47 // pred_check
          %p366 = pneg %p139
        $region50: #{tpu_custom_call.1} parent=47 // pred_check_branch
          %368 = sbr.rel (%p366) target = $region52
        $region51: #{tpu_custom_call.1} parent=47 // pred_region
          %s369 = sand.u32 %s124, 1
          %s370 = scalar_lea.sflag [#allocation4], %s369
          %s371 = sand.u32 %s124, 1
          %s372 = smul.addr %s371, 8
          %s373 = scalar_lea.vmem [#allocation7], %s372
          %374 = dma.done %s370, 128
        $region52: #{tpu_custom_call.1} parent=47 // pred_fallthru
          _
      $region48: #{tpu_custom_call.1} parent=5 // pred_fallthru
        _
    $region6: #{tpu_custom_call.1} parent=1 // loop_footer
      %s22 = sadd.s32 1, %s18
    $region7: #{tpu_custom_call.1} parent=1 // loop_footer_branch
      %17 = sbr.rel target = $region3
    $region8: #{tpu_custom_call.1} parent=1 // loop_exit
      _
    %375 = vsyncpa [#allocation3], 1
    %s376 = scalar_lea.sflag [#allocation3], 1
    %377 = vsyncpa %s376, 1
    %378 = vsyncpa [#allocation6], 1
    %s379 = scalar_lea.sflag [#allocation6], 1
    %380 = vsyncpa %s379, 1
    %381 = vsyncpa [#allocation4], 1
    %s382 = scalar_lea.sflag [#allocation4], 1
    %383 = vsyncpa %s382, 1

</llo_original>
